<compile_context>
chip_gen: v7x
topology: tpu7x:2x2x1
jax: 0.10.0
libtpu: 0.0.40
codegen_flags: <defaults>
</compile_context>

<pallas_src>
import functools
import math

import numpy as np
import jax
import jax.numpy as jnp
from jax.experimental import pallas as pl
from jax.experimental.pallas import tpu as pltpu


def _build_pe(window: int, d_model: int) -> np.ndarray:
    """Deterministic positional-encoding table, exactly mirroring __init__."""
    pe = np.zeros((window, d_model), dtype=np.float32)
    for pos in range(window):
        for i in range(0, d_model, 2):
            pe[pos, i] = np.sin(pos / 10000 ** (2 * i / d_model))
        for i in range(1, d_model, 2):
            pe[pos, i] = np.cos(pos / 10000 ** (2 * (i + 1) / d_model))
    return pe  # (window, d_model)


def _round_up(n: int, m: int) -> int:
    return ((n + m - 1) // m) * m


def _pick_tile(dim: int, align: int, target: int) -> int:
    """Largest divisor of `dim` that is a multiple of `align` and <= target.
    `dim` is always pre-padded to a multiple of `align` by the wrapper."""
    if dim % align != 0:
        return dim
    best = align
    for t in range(align, min(dim, max(target, align)) + 1, align):
        if dim % t == 0:
            best = t
    return best


def _pe_kernel(x_ref, pe_ref, o_ref, *, scale):
    # Elementwise hot path on a lane-dense (tR, tC) tile.
    # pe_ref is a (1, tC) row broadcast across the sublane (row) dimension.
    o_ref[...] = x_ref[...] * scale + pe_ref[...]


def positional_encoding(
    x: jax.Array,
    pe_flat: jax.Array,
    d_model: int,
    *,
    force_pallas: bool = False,
    tile_bytes_target: int = 4 << 20,   # ~4 MiB per x tile: <10% per-step overhead on v7x
) -> jax.Array:
    """x: (B, S, D); pe_flat: (1, window*D) flattened row-major PE table.

    Returns (B, S, D): x * sqrt(d_model) + pe[:S, :] broadcast over batch.
    """
    B, S, D = x.shape
    C = S * D
    assert pe_flat.shape[1] >= C, "PE window shorter than sequence"
    scale = float(math.sqrt(float(d_model)))

    # Small-input bypass: the pallas_call launch cost dominates tiny tensors;
    # plain XLA fuses this elementwise op for free.
    if not force_pallas and B * C < (64 * 1024):
        pe = pe_flat[:, :C].reshape(1, S, D).astype(x.dtype)
        return x * scale + pe

    itemsize = x.dtype.itemsize
    x_flat = x.reshape(B, C)                 # contiguous reshape, no data movement

    # Pad fused column axis to a multiple of 128 (lane-dense, unmasked `vst`)
    # and batch rows to a multiple of 8 (unmasked sublane stores).
    C_pad = _round_up(C, 128)
    B_pad = _round_up(B, 8)

    pe_row = pe_flat[:, :C].astype(x.dtype)
    if C_pad != C:
        pe_row = jnp.pad(pe_row, ((0, 0), (0, C_pad - C)))
    if (B_pad != B) or (C_pad != C):
        x_flat = jnp.pad(x_flat, ((0, B_pad - B), (0, C_pad - C)))

    # Tile sizing: rows first (multiple of 8, <=256), then columns from the
    # remaining byte budget (multiple of 128, no artificial floor).
    tR = _pick_tile(B_pad, 8, 256)
    col_target = max(128, (((tile_bytes_target // itemsize) // tR) // 128) * 128)
    tC = _pick_tile(C_pad, 128, col_target)
    n_c, n_r = C_pad // tC, B_pad // tR

    tile_bytes = tR * tC * itemsize
    # 4 double-buffered x/out tiles + PE row; keep explicit headroom but stay
    # inside v7x's 64 MiB physical VMEM.
    vmem_limit = min(48 << 20, max(40 << 20, 6 * tile_bytes))

    kernel = functools.partial(_pe_kernel, scale=scale)
    out_shape = jax.ShapeDtypeStruct((B_pad, C_pad), x.dtype)
    compiler_params = pltpu.CompilerParams(
        dimension_semantics=("parallel", "parallel"),
        vmem_limit_bytes=vmem_limit,
    )

    if n_c >= 2:
        # Column axis OUTER: the PE block index depends only on `c`, so it is
        # constant across consecutive inner (row) steps and not re-fetched.
        out_flat = pl.pallas_call(
            kernel,
            out_shape=out_shape,
            grid=(n_c, n_r),
            in_specs=[
                pl.BlockSpec((tR, tC), lambda c, r: (r, c)),   # x tile
                pl.BlockSpec((1, tC), lambda c, r: (0, c)),    # pe row slice
            ],
            out_specs=pl.BlockSpec((tR, tC), lambda c, r: (r, c)),
            compiler_params=compiler_params,
        )(x_flat, pe_row)
    else:
        # Single column block: put rows outer so the megacore (v7x) can shard
        # the only axis with >1 block across both TensorCores.
        out_flat = pl.pallas_call(
            kernel,
            out_shape=out_shape,
            grid=(n_r, n_c),
            in_specs=[
                pl.BlockSpec((tR, tC), lambda r, c: (r, c)),
                pl.BlockSpec((1, tC), lambda r, c: (0, c)),
            ],
            out_specs=pl.BlockSpec((tR, tC), lambda r, c: (r, c)),
            compiler_params=compiler_params,
        )(x_flat, pe_row)

    return out_flat[:B, :C].reshape(B, S, D)


if __name__ == "__main__":
    # Small shapes implied by the forward: (batch, seq, d_model)
    batch, window, seq, d_model = 2, 16, 8, 32

    key = jax.random.PRNGKey(0)
    x = jax.random.normal(key, (batch, seq, d_model), dtype=jnp.float32)

    pe_np = _build_pe(window, d_model)                          # (window, d_model)
    pe_flat = jnp.asarray(pe_np.reshape(1, window * d_model))   # (1, window*d_model)

    scale = jnp.float32(math.sqrt(float(d_model)))
    ref = x * scale + jnp.asarray(pe_np)[None, :seq, :]

    # 1) Force the Pallas kernel path (exercises the B=2 -> 8 row padding).
    out_k = jax.block_until_ready(
        positional_encoding(x, pe_flat, d_model, force_pallas=True))
    np.testing.assert_allclose(np.asarray(out_k), np.asarray(ref), rtol=1e-6, atol=1e-6)

    # 2) Default wrapper (small-input bypass) on the same shape.
    out_d = jax.block_until_ready(positional_encoding(x, pe_flat, d_model))
    np.testing.assert_allclose(np.asarray(out_d), np.asarray(ref), rtol=1e-6, atol=1e-6)

    # 3) Un-8-aligned batch + non-128-multiple fused column axis + multiple
    #    column tiles (small tile budget) to exercise padding and the
    #    column-outer grid branch.
    batch2, window2, seq2, d_model2 = 6, 64, 48, 100
    x2 = jax.random.normal(jax.random.PRNGKey(0), (batch2, seq2, d_model2),
                           dtype=jnp.float32)
    pe2_np = _build_pe(window2, d_model2)
    pe2_flat = jnp.asarray(pe2_np.reshape(1, window2 * d_model2))
    out2 = jax.block_until_ready(
        positional_encoding(x2, pe2_flat, d_model2,
                            force_pallas=True, tile_bytes_target=64 << 10))
    ref2 = x2 * jnp.float32(math.sqrt(float(d_model2))) \
        + jnp.asarray(pe2_np)[None, :seq2, :]
    np.testing.assert_allclose(np.asarray(out2), np.asarray(ref2), rtol=1e-6, atol=1e-6)

    print("KERNEL_OK")
</pallas_src>

<mosaic_0001>
module attributes {stable_mosaic.version = 11 : i64} {
  func.func @_pe_kernel(%arg0: i32, %arg1: i32, %arg2: memref<8x256xf32, #tpu.memory_space<vmem>>, %arg3: memref<1x256xf32, #tpu.memory_space<vmem>>, %arg4: memref<8x256xf32, #tpu.memory_space<vmem>>) attributes {dimension_semantics = [#tpu.dimension_semantics<parallel>, #tpu.dimension_semantics<parallel>], iteration_bounds = array<i64: 1, 1>, scalar_prefetch = 0 : i64, scratch_operands = 0 : i64, tpu.core_type = #tpu.core_type<tc>, window_params = [{transform_indices = @transform_0, window_bounds = array<i64: 8, 256>}, {transform_indices = @transform_1, window_bounds = array<i64: 1, 256>}, {transform_indices = @transform_2, window_bounds = array<i64: 8, 256>}]} {
    %c0 = arith.constant 0 : index
    %c0_0 = arith.constant 0 : index
    %0 = vector.load %arg2[%c0, %c0_0] : memref<8x256xf32, #tpu.memory_space<vmem>>, vector<8x256xf32>
    %cst = arith.constant 5.65685415 : f32
    %1 = vector.broadcast %cst : f32 to vector<8x256xf32>
    %2 = arith.mulf %0, %1 : vector<8x256xf32>
    %c0_1 = arith.constant 0 : index
    %c0_2 = arith.constant 0 : index
    %3 = vector.load %arg3[%c0_1, %c0_2] : memref<1x256xf32, #tpu.memory_space<vmem>>, vector<1x256xf32>
    %4 = vector.broadcast %3 : vector<1x256xf32> to vector<8x256xf32>
    %5 = arith.addf %2, %4 : vector<8x256xf32>
    %c0_3 = arith.constant 0 : index
    %c0_4 = arith.constant 0 : index
    %6 = vector.load %arg4[%c0_3, %c0_4] : memref<8x256xf32, #tpu.memory_space<vmem>>, vector<8x256xf32>
    tpu.vector_store %arg4[%c0_3, %c0_4], %5 {strides = array<i32>} : memref<8x256xf32, #tpu.memory_space<vmem>>, vector<8x256xf32>,
    return
  }
  func.func @transform_0(%arg0: i32, %arg1: i32) -> (i32, i32) {
    %c0_i32 = arith.constant 0 : i32
    return %arg0, %arg1 : i32, i32
  }
  func.func @transform_1(%arg0: i32, %arg1: i32) -> (i32, i32) {
    %c0_i32 = arith.constant 0 : i32
    %c0_i32_0 = arith.constant 0 : i32
    return %c0_i32, %arg1 : i32, i32
  }
  func.func @transform_2(%arg0: i32, %arg1: i32) -> (i32, i32) {
    %c0_i32 = arith.constant 0 : i32
    return %arg0, %arg1 : i32, i32
  }
}

</mosaic_0001>

<llo_original>
// kernel: tpu_custom_call.1
$region0: #{tpu_custom_call.1}
  #allocation0 [shape = 'u32[]', space=smem, size = 0x4, offset = 0x4, fixed_abs, tag = 'smem constant byte address 0x4 - core index']
  #allocation1 [shape = 'u32[144,128]{1,0:T(1,128)}', space=vmem, size = 0x12000, scoped, tag = 'internal scratch']
  %s0 = inlined_call_operand.hbm [shape: f32[8,256], index: 0, kind: input, shape index: {}]
  %s1 = inlined_call_operand.vmem [shape: f32[1,256], index: 1, kind: input, shape index: {}]
  %s2 = inlined_call_operand.hbm [shape: f32[8,256], index: 2, kind: output, shape index: {}]
  %s3 = sld [smem:[#allocation0]]
  $region22: #{tpu_custom_call.1} parent=0
    _
  %s5 = ssub.s32 1, %s3
  %s6 = scalar_select 0, %s5, %s3
  $region1: #{tpu_custom_call.1} parent=0
    #allocation2 [shape = 'u8[8192]{0}', space=vmem, size = 0x2000, scoped, tag = 'input window, operand 0, single buffered']
    #allocation3 [shape = 's32[1]{0}', space=sflag, size = 0x4, scoped, tag = 'scoped memory for tpu_custom_call.1']
    #allocation4 [shape = 's32[1]{0}', space=sflag, size = 0x4, scoped, tag = 'scoped memory for tpu_custom_call.1']
    #allocation5 [shape = 'u8[8192]{0}', space=vmem, size = 0x2000, scoped, tag = 'output window, operand 0, single buffered']
    %7 = vsyncpa [#allocation3], 0
    %8 = vsyncpa [#allocation4], 0
    // Predicated region
    $region2: #{tpu_custom_call.1} parent=1 // pred_check
      _
    $region3: #{tpu_custom_call.1} parent=1 // pred_check_branch
      %10 = sbr.rel (0) target = $region5
    $region4: #{tpu_custom_call.1} parent=1 // pred_region
      %s12 = ssub.s32 256, 256
      %13 = vsyncadd [#allocation3], %s12
      %s15 = sshll.u32 [#allocation2], 4
      %s16 = int_to_ptr.vmem [resolvable:$true] %s15
      %18 = dma.hbm_to_vmem [thread:$0]  %s0, 256, %s16, [#allocation3]
    $region5: #{tpu_custom_call.1} parent=1 // pred_fallthru
      _
    // Predicated region
    $region6: #{tpu_custom_call.1} parent=1 // pred_check
      _
    $region7: #{tpu_custom_call.1} parent=1 // pred_check_branch
      %20 = sbr.rel (0) target = $region9
    $region8: #{tpu_custom_call.1} parent=1 // pred_region
      _
    $region9: #{tpu_custom_call.1} parent=1 // pred_fallthru
      _
    // Predicated region
    $region10: #{tpu_custom_call.1} parent=1 // pred_check
      _
    $region11: #{tpu_custom_call.1} parent=1 // pred_check_branch
      %22 = sbr.rel (0) target = $region13
    $region12: #{tpu_custom_call.1} parent=1 // pred_region
      %23 = dma.done [#allocation3], 256
    $region13: #{tpu_custom_call.1} parent=1 // pred_fallthru
      _
    %v24 = vld [vmem:[#allocation2] sm:$0xff]
    %v25 = vld [vmem:[#allocation2 + $0x8] sm:$0xff]
    %v26 = vmul.f32 %v24, 5.656854
    %v27 = vmul.f32 %v25, 5.656854
    %v28 = vld [vmem:[%s1] sm:$0x3]
    %v30 = vlaneseq
    %v31 = vshrl.u32 %v30, 7
    %v32 = vsub.s32 0, %v31
    %v33 = vrot.slane %v28, %v32
    %v34 = vlaneseq
    %v35 = vshrl.u32 %v34, 7
    %v36 = vsub.s32 1, %v35
    %v37 = vrot.slane %v28, %v36
    %v40 = vadd.f32 %v26, %v33
    %v41 = vadd.f32 %v27, %v37
    %42 = vst [vmem:[#allocation5] sm:$0xff] %v40
    %43 = vst [vmem:[#allocation5 + $0x8] sm:$0xff] %v41
    // Predicated region
    $region14: #{tpu_custom_call.1} parent=1 // pred_check
      _
    $region15: #{tpu_custom_call.1} parent=1 // pred_check_branch
      %45 = sbr.rel (0) target = $region17
    $region16: #{tpu_custom_call.1} parent=1 // pred_region
      %s47 = ssub.s32 256, 256
      %48 = vsyncadd [#allocation4], %s47
      %s50 = sshll.u32 [#allocation5], 4
      %s51 = int_to_ptr.vmem [resolvable:$true] %s50
      %53 = dma.vmem_to_hbm [thread:$0]  %s51, 256, %s2, [#allocation4]
    $region17: #{tpu_custom_call.1} parent=1 // pred_fallthru
      _
    // Predicated region
    $region18: #{tpu_custom_call.1} parent=1 // pred_check
      _
    $region19: #{tpu_custom_call.1} parent=1 // pred_check_branch
      %55 = sbr.rel (0) target = $region21
    $region20: #{tpu_custom_call.1} parent=1 // pred_region
      %56 = dma.done [#allocation4], 256
    $region21: #{tpu_custom_call.1} parent=1 // pred_fallthru
      _
    %57 = vsyncpa [#allocation3], 1
    %58 = vsyncpa [#allocation4], 1

</llo_original>
